<compile_context>
chip_gen: v5e
topology: v5e:2x2
jax: 0.10.0
libtpu: 0.0.40
codegen_flags: <defaults>
</compile_context>

<pallas_src>
import functools

import jax
import jax.numpy as jnp
from jax.experimental import pallas as pl
from jax.experimental.pallas import tpu as pltpu


def _ceil_mult(x, m):
    return ((x + m - 1) // m) * m


def _pick_tile_b(batch, tile_b):
    """Choose a batch tile: <= requested, >= 8 grid steps for large B, x16 rows."""
    tile_b = int(tile_b)
    tile_b = min(tile_b, _ceil_mult(batch, 16))          # never bigger than needed
    target_steps = 8                                      # pipelining + 2 TCs on v7x
    if batch >= target_steps * 16:
        tile_b = min(tile_b, _ceil_mult(pl.cdiv(batch, target_steps), 16))
    return max(16, _ceil_mult(tile_b, 16))                # 16-row multiple (bf16 safe)


def _combine_mlp_kernel(n_layers, operand_dtype, x_ref, *rest):
    """rest = (W0, b0, W1, b1, ..., W_{n-1}, b_{n-1}, out_ref)."""
    out_ref = rest[-1]
    wb_refs = rest[:-1]
    op_dt = jnp.dtype(operand_dtype)

    v = x_ref[...]
    for i in range(n_layers):
        w = wb_refs[2 * i][...]
        b = wb_refs[2 * i + 1][...]
        acc = jnp.dot(v, w, preferred_element_type=jnp.float32)   # MXU, f32 accumulate
        v = jnp.maximum(acc + b.astype(jnp.float32), 0.0)         # f32 VPU epilogue
        if (i + 1 < n_layers) and op_dt != jnp.dtype(jnp.float32):
            v = v.astype(op_dt)                                    # bf16 into next MXU
    out_ref[...] = v.astype(out_ref.dtype)


def combine_mlp(pair, cnn, rnn, weights, biases, *, tile_b=1024,
                operand_dtype=jnp.float32):
    """Pallas forward pass of Combine_MLP.

    Args:
      pair, cnn, rnn: (B, F_pair/F_cnn/F_rnn) arrays; F_pair+F_cnn+F_rnn must
        equal weights[0].shape[0].
      weights: list of (in, out) matrices (transposed vs. torch Linear).
      biases:  list of (out,) vectors.
      tile_b: requested batch tile (clamped / rounded internally).
      operand_dtype: dtype fed to the MXU (f32 default; bf16 on v6e/v7x for perf).
    Returns:
      (B, weights[-1].shape[1]) float32 array.
    """
    n_layers = len(weights)
    assert n_layers >= 1
    batch = pair.shape[0]
    feat = pair.shape[1] + cnn.shape[1] + rnn.shape[1]
    assert weights[0].shape[0] == feat
    out_dim = weights[-1].shape[1]

    # Single concat (fuses with any caller ops under jit) -> one DMA per tile.
    x = jnp.concatenate([pair, cnn, rnn], axis=-1).astype(operand_dtype)

    wb_args = []
    for w, b in zip(weights, biases):
        wb_args.append(w.astype(operand_dtype))
        wb_args.append(b.reshape(1, -1).astype(jnp.float32))

    tb = _pick_tile_b(batch, tile_b)
    grid = (pl.cdiv(batch, tb),)

    x_spec = pl.BlockSpec((tb, feat), lambda i: (i, 0))

    def resident_spec(a):
        # Full-array VMEM-resident block (constant index_map -> fetched once).
        return pl.BlockSpec(a.shape, lambda i: (0, 0))

    in_specs = [x_spec] + [resident_spec(a) for a in wb_args]
    out_spec = pl.BlockSpec((tb, out_dim), lambda i: (i, 0))

    # Advisory cost estimate for the XLA scheduler.
    flops = 0
    k = feat
    for w in weights:
        flops += 2 * batch * k * w.shape[1]
        k = w.shape[1]
    bytes_accessed = (
        x.size * x.dtype.itemsize
        + sum(a.size * a.dtype.itemsize for a in wb_args)
        + batch * out_dim * 4)
    cost = pl.CostEstimate(flops=flops, transcendentals=0,
                           bytes_accessed=bytes_accessed)

    kernel = functools.partial(_combine_mlp_kernel, n_layers, operand_dtype)

    return pl.pallas_call(
        kernel,
        out_shape=jax.ShapeDtypeStruct((batch, out_dim), jnp.float32),
        grid=grid,
        in_specs=in_specs,
        out_specs=out_spec,
        compiler_params=pltpu.CompilerParams(
            dimension_semantics=("parallel",)),
        cost_estimate=cost,
    )(x, *wb_args)


def init_params(key, layer_sizes):
    """Deterministic init matching torch.nn.Linear shapes (stored transposed)."""
    weights, biases = [], []
    for in_size, out_size in zip(layer_sizes[:-1], layer_sizes[1:]):
        key, kw, kb = jax.random.split(key, 3)
        bound = 1.0 / float(jnp.sqrt(jnp.float32(in_size)))
        # torch Linear weight is (out, in); store as (in, out) for x @ W.
        w = jax.random.uniform(kw, (in_size, out_size), jnp.float32, -bound, bound)
        b = jax.random.uniform(kb, (out_size,), jnp.float32, -bound, bound)
        weights.append(w)
        biases.append(b)
    return weights, biases


def reference(pair, cnn, rnn, weights, biases):
    v = jnp.concatenate([pair, cnn, rnn], axis=-1)
    for w, b in zip(weights, biases):
        v = jnp.maximum(v @ w + b, 0.0)
    return v


if __name__ == "__main__":
    # config['combine_mlp_layers'] = [48, 32, 16]
    layer_sizes = [48, 32, 16]
    batch = 2
    f_pair, f_cnn, f_rnn = 16, 16, 16  # concat -> 48 == layer_sizes[0]

    key = jax.random.PRNGKey(0)
    k1, k2, k3, kp = jax.random.split(key, 4)
    pair = jax.random.normal(k1, (batch, f_pair), jnp.float32)
    cnn = jax.random.normal(k2, (batch, f_cnn), jnp.float32)
    rnn = jax.random.normal(k3, (batch, f_rnn), jnp.float32)

    weights, biases = init_params(kp, layer_sizes)

    fwd = jax.jit(combine_mlp, static_argnames=("tile_b", "operand_dtype"))

    out = jax.block_until_ready(fwd(pair, cnn, rnn, weights, biases))
    ref = reference(pair, cnn, rnn, weights, biases)
    assert out.shape == (batch, layer_sizes[-1])
    assert jnp.allclose(out, ref, atol=1e-5, rtol=1e-5), (out, ref)

    # Larger, non-multiple batch -> multi-step parallel grid with ragged tail.
    kb1, kb2, kb3 = jax.random.split(jax.random.PRNGKey(1), 3)
    big_b = 1000
    pair_b = jax.random.normal(kb1, (big_b, f_pair), jnp.float32)
    cnn_b = jax.random.normal(kb2, (big_b, f_cnn), jnp.float32)
    rnn_b = jax.random.normal(kb3, (big_b, f_rnn), jnp.float32)
    out_b = jax.block_until_ready(fwd(pair_b, cnn_b, rnn_b, weights, biases))
    ref_b = reference(pair_b, cnn_b, rnn_b, weights, biases)
    assert out_b.shape == (big_b, layer_sizes[-1])
    assert jnp.allclose(out_b, ref_b, atol=1e-5, rtol=1e-5)

    # bf16 MXU-operand path (v6e/v7x perf lever; f32 accumulate + f32 epilogue).
    out_bf = jax.block_until_ready(
        fwd(pair_b, cnn_b, rnn_b, weights, biases, operand_dtype=jnp.bfloat16))
    assert out_bf.shape == (big_b, layer_sizes[-1])
    assert bool(jnp.all(jnp.isfinite(out_bf)))
    assert jnp.allclose(out_bf, ref_b, atol=0.1, rtol=0.1)

    print("KERNEL_OK")
</pallas_src>

<mosaic_0001>
module attributes {stable_mosaic.version = 11 : i64} {
  func.func @_combine_mlp_kernel(%arg0: i32, %arg1: memref<16x48xf32, #tpu.memory_space<vmem>>, %arg2: memref<48x32xf32, #tpu.memory_space<vmem>>, %arg3: memref<1x32xf32, #tpu.memory_space<vmem>>, %arg4: memref<32x16xf32, #tpu.memory_space<vmem>>, %arg5: memref<1x16xf32, #tpu.memory_space<vmem>>, %arg6: memref<16x16xf32, #tpu.memory_space<vmem>>) attributes {dimension_semantics = [#tpu.dimension_semantics<parallel>], iteration_bounds = array<i64: 1>, scalar_prefetch = 0 : i64, scratch_operands = 0 : i64, tpu.core_type = #tpu.core_type<tc>, window_params = [{transform_indices = @transform_0, window_bounds = array<i64: 16, 48>}, {pipeline_mode = #tpu.pipeline_mode<synchronous>, transform_indices = @transform_1, window_bounds = array<i64: 48, 32>}, {pipeline_mode = #tpu.pipeline_mode<synchronous>, transform_indices = @transform_2, window_bounds = array<i64: 1, 32>}, {pipeline_mode = #tpu.pipeline_mode<synchronous>, transform_indices = @transform_3, window_bounds = array<i64: 32, 16>}, {pipeline_mode = #tpu.pipeline_mode<synchronous>, transform_indices = @transform_4, window_bounds = array<i64: 1, 16>}, {transform_indices = @transform_5, window_bounds = array<i64: 16, 16>}]} {
    %c0 = arith.constant 0 : index
    %c0_0 = arith.constant 0 : index
    %0 = vector.load %arg1[%c0, %c0_0] : memref<16x48xf32, #tpu.memory_space<vmem>>, vector<16x48xf32>
    %c0_1 = arith.constant 0 : index
    %c0_2 = arith.constant 0 : index
    %1 = vector.load %arg2[%c0_1, %c0_2] : memref<48x32xf32, #tpu.memory_space<vmem>>, vector<48x32xf32>
    %c0_3 = arith.constant 0 : index
    %c0_4 = arith.constant 0 : index
    %2 = vector.load %arg3[%c0_3, %c0_4] : memref<1x32xf32, #tpu.memory_space<vmem>>, vector<1x32xf32>
    %cst = arith.constant dense<0.000000e+00> : vector<16x32xf32>
    %3 = tpu.matmul %0, %1, %cst {dimension_numbers = #tpu.dot_dimension_numbers<[1], [0], [0], [1], [0, 0, 1, 1], [], []>} : vector<16x48xf32>, vector<48x32xf32>, vector<16x32xf32> -> vector<16x32xf32>
    %4 = vector.broadcast %2 : vector<1x32xf32> to vector<16x32xf32>
    %5 = arith.addf %3, %4 : vector<16x32xf32>
    %cst_5 = arith.constant 0.000000e+00 : f32
    %6 = vector.broadcast %cst_5 : f32 to vector<16x32xf32>
    %7 = arith.maximumf %5, %6 : vector<16x32xf32>
    %c0_6 = arith.constant 0 : index
    %c0_7 = arith.constant 0 : index
    %8 = vector.load %arg4[%c0_6, %c0_7] : memref<32x16xf32, #tpu.memory_space<vmem>>, vector<32x16xf32>
    %c0_8 = arith.constant 0 : index
    %c0_9 = arith.constant 0 : index
    %9 = vector.load %arg5[%c0_8, %c0_9] : memref<1x16xf32, #tpu.memory_space<vmem>>, vector<1x16xf32>
    %cst_10 = arith.constant dense<0.000000e+00> : vector<16x16xf32>
    %10 = tpu.matmul %7, %8, %cst_10 {dimension_numbers = #tpu.dot_dimension_numbers<[1], [0], [0], [1], [0, 0, 1, 1], [], []>} : vector<16x32xf32>, vector<32x16xf32>, vector<16x16xf32> -> vector<16x16xf32>
    %11 = vector.broadcast %9 : vector<1x16xf32> to vector<16x16xf32>
    %12 = arith.addf %10, %11 : vector<16x16xf32>
    %cst_11 = arith.constant 0.000000e+00 : f32
    %13 = vector.broadcast %cst_11 : f32 to vector<16x16xf32>
    %14 = arith.maximumf %12, %13 : vector<16x16xf32>
    %c0_12 = arith.constant 0 : index
    %c0_13 = arith.constant 0 : index
    %15 = vector.load %arg6[%c0_12, %c0_13] : memref<16x16xf32, #tpu.memory_space<vmem>>, vector<16x16xf32>
    tpu.vector_store %arg6[%c0_12, %c0_13], %14 {strides = array<i32>} : memref<16x16xf32, #tpu.memory_space<vmem>>, vector<16x16xf32>,
    return
  }
  func.func @transform_0(%arg0: i32) -> (i32, i32) {
    %c0_i32 = arith.constant 0 : i32
    %c0_i32_0 = arith.constant 0 : i32
    return %arg0, %c0_i32 : i32, i32
  }
  func.func @transform_1(%arg0: i32) -> (i32, i32) {
    %c0_i32 = arith.constant 0 : i32
    %c0_i32_0 = arith.constant 0 : i32
    %c0_i32_1 = arith.constant 0 : i32
    return %c0_i32, %c0_i32_0 : i32, i32
  }
  func.func @transform_2(%arg0: i32) -> (i32, i32) {
    %c0_i32 = arith.constant 0 : i32
    %c0_i32_0 = arith.constant 0 : i32
    %c0_i32_1 = arith.constant 0 : i32
    return %c0_i32, %c0_i32_0 : i32, i32
  }
  func.func @transform_3(%arg0: i32) -> (i32, i32) {
    %c0_i32 = arith.constant 0 : i32
    %c0_i32_0 = arith.constant 0 : i32
    %c0_i32_1 = arith.constant 0 : i32
    return %c0_i32, %c0_i32_0 : i32, i32
  }
  func.func @transform_4(%arg0: i32) -> (i32, i32) {
    %c0_i32 = arith.constant 0 : i32
    %c0_i32_0 = arith.constant 0 : i32
    %c0_i32_1 = arith.constant 0 : i32
    return %c0_i32, %c0_i32_0 : i32, i32
  }
  func.func @transform_5(%arg0: i32) -> (i32, i32) {
    %c0_i32 = arith.constant 0 : i32
    %c0_i32_0 = arith.constant 0 : i32
    return %arg0, %c0_i32 : i32, i32
  }
}

</mosaic_0001>

<llo_original>
// kernel: combine_mlp.1
$region0: #{combine_mlp.1}
  #allocation0 [shape = 'u32[]', space=smem, size = 0x4, offset = 0x4, fixed_abs, tag = 'smem constant byte address 0x4 - core index']
  #allocation1 [shape = 'u32[72,128]{1,0:T(1,128)}', space=vmem, size = 0x9000, scoped, tag = 'internal scratch']
  %s0 = inlined_call_operand.vmem [shape: f32[2,48], index: 0, kind: input, shape index: {}]
  %s1 = inlined_call_operand.vmem [shape: f32[48,32], index: 1, kind: input, shape index: {}]
  %s2 = inlined_call_operand.vmem [shape: f32[1,32], index: 2, kind: input, shape index: {}]
  %s3 = inlined_call_operand.vmem [shape: f32[32,16], index: 3, kind: input, shape index: {}]
  %s4 = inlined_call_operand.vmem [shape: f32[1,16], index: 4, kind: input, shape index: {}]
  %s5 = inlined_call_operand.hbm [shape: f32[2,16], index: 5, kind: output, shape index: {}]
  %s6 = sld [smem:[#allocation0]]
  $region30: #{combine_mlp.1} parent=0
    _
  %s8 = ssub.s32 1, %s6
  %s9 = scalar_select 0, %s8, %s6
  $region1: #{combine_mlp.1} parent=0
    #allocation2 [shape = 'u8[8192]{0}', space=vmem, size = 0x2000, scoped, tag = 'output window, operand 0, single buffered']
    #allocation3 [shape = 's32[1]{0}', space=sflag, size = 0x4, scoped, tag = 'scoped memory for combine_mlp.1']
    %10 = vsyncpa [#allocation3], 0
    // Predicated region
    $region2: #{combine_mlp.1} parent=1 // pred_check
      _
    $region3: #{combine_mlp.1} parent=1 // pred_check_branch
      %12 = sbr.rel (0) target = $region5
    $region4: #{combine_mlp.1} parent=1 // pred_region
      _
    $region5: #{combine_mlp.1} parent=1 // pred_fallthru
      _
    // Predicated region
    $region6: #{combine_mlp.1} parent=1 // pred_check
      _
    $region7: #{combine_mlp.1} parent=1 // pred_check_branch
      %14 = sbr.rel (0) target = $region9
    $region8: #{combine_mlp.1} parent=1 // pred_region
      _
    $region9: #{combine_mlp.1} parent=1 // pred_fallthru
      _
    // Predicated region
    $region10: #{combine_mlp.1} parent=1 // pred_check
      _
    $region11: #{combine_mlp.1} parent=1 // pred_check_branch
      %16 = sbr.rel (0) target = $region13
    $region12: #{combine_mlp.1} parent=1 // pred_region
      _
    $region13: #{combine_mlp.1} parent=1 // pred_fallthru
      _
    // Predicated region
    $region14: #{combine_mlp.1} parent=1 // pred_check
      _
    $region15: #{combine_mlp.1} parent=1 // pred_check_branch
      %18 = sbr.rel (0) target = $region17
    $region16: #{combine_mlp.1} parent=1 // pred_region
      _
    $region17: #{combine_mlp.1} parent=1 // pred_fallthru
      _
    // Predicated region
    $region18: #{combine_mlp.1} parent=1 // pred_check
      _
    $region19: #{combine_mlp.1} parent=1 // pred_check_branch
      %20 = sbr.rel (0) target = $region21
    $region20: #{combine_mlp.1} parent=1 // pred_region
      _
    $region21: #{combine_mlp.1} parent=1 // pred_fallthru
      _
    %v21 = vld [vmem:[%s0] sm:$0xff]
    %v22 = vld [vmem:[%s0 + $0x8] sm:$0xff]
    %v23 = vld [vmem:[%s1] sm:$0xff]
    %v24 = vld [vmem:[%s1 + $0x8] sm:$0xff]
    %v25 = vld [vmem:[%s1 + $0x10] sm:$0xff]
    %v26 = vld [vmem:[%s1 + $0x18] sm:$0xff]
    %v27 = vld [vmem:[%s1 + $0x20] sm:$0xff]
    %v28 = vld [vmem:[%s1 + $0x28] sm:$0xff]
    %v29 = vld [vmem:[%s2] sm:$0x1]
    %v31 = vperm.slane %v29, 0
    %vm33 = vcmask 392192
    %v35 = vsel %vm33, %v21, 0
    %v38 = vsel %vm33, %v22, 0
    %40 = vmatpush.msra.mxu0 0.0
    %41 = vmatpush.msra.mxu0 0.0
    %42 = vmatpush.msra.mxu0 0.0
    %43 = vmatpush.msra.mxu0 0.0
    %44 = vmatpush.msra.mxu0 0.0
    %45 = vmatpush.msra.mxu0 0.0
    %46 = vmatpush.msra.mxu0 0.0
    %47 = vmatpush.msra.mxu0 0.0
    %48 = vmatpush.msra.mxu0 0.0
    %49 = vmatpush.msra.mxu0 0.0
    %50 = vmatpush.msra.mxu0 %v28
    %51 = vmatpush.msra.mxu0 %v27
    %52 = vmatpush.msra.mxu0 %v26
    %53 = vmatpush.msra.mxu0 %v25
    %54 = vmatpush.msra.mxu0 %v24
    %55 = vmatpush.msra.mxu0 %v23
    %56 = vmatmul.f32.gmra.mxu0 %v35
    %v57 = vpop.f32.mrf.mxu0
    %v58 = vadd.f32 %v31, %v57
    %59 = vmatmul.f32.gmra.mxu0 %v38
    %v60 = vpop.f32.mrf.mxu0
    %v61 = vadd.f32 %v31, %v60
    %62 = vdwg.mxu0
    %v63 = vmax.f32 %v58, 0.0
    %v64 = vmax.f32 %v61, 0.0
    %v65 = vld [vmem:[%s3] sm:$0xff]
    %v66 = vld [vmem:[%s3 + $0x8] sm:$0xff]
    %v67 = vld [vmem:[%s3 + $0x10] sm:$0xff]
    %v68 = vld [vmem:[%s3 + $0x18] sm:$0xff]
    %v69 = vld [vmem:[%s4] sm:$0x1]
    %v71 = vperm.slane %v69, 0
    %vm73 = vcmask 261120
    %v75 = vsel %vm73, %v63, 0
    %v78 = vsel %vm73, %v64, 0
    %80 = vmatpush.msra.mxu0 0.0
    %81 = vmatpush.msra.mxu0 0.0
    %82 = vmatpush.msra.mxu0 0.0
    %83 = vmatpush.msra.mxu0 0.0
    %84 = vmatpush.msra.mxu0 0.0
    %85 = vmatpush.msra.mxu0 0.0
    %86 = vmatpush.msra.mxu0 0.0
    %87 = vmatpush.msra.mxu0 0.0
    %88 = vmatpush.msra.mxu0 0.0
    %89 = vmatpush.msra.mxu0 0.0
    %90 = vmatpush.msra.mxu0 0.0
    %91 = vmatpush.msra.mxu0 0.0
    %92 = vmatpush.msra.mxu0 %v68
    %93 = vmatpush.msra.mxu0 %v67
    %94 = vmatpush.msra.mxu0 %v66
    %95 = vmatpush.msra.mxu0 %v65
    %96 = vmatmul.f32.gmra.mxu0 %v75
    %v97 = vpop.f32.mrf.mxu0
    %v98 = vadd.f32 %v71, %v97
    %99 = vmatmul.f32.gmra.mxu0 %v78
    %v100 = vpop.f32.mrf.mxu0
    %v101 = vadd.f32 %v71, %v100
    %102 = vdwg.mxu0
    %v103 = vmax.f32 %v98, 0.0
    %v104 = vmax.f32 %v101, 0.0
    %vm105 = vcmask 130048
    %106 = vst.msk [vmem:[#allocation2] sm:$0xff] %vm105, %v103
    %107 = vst.msk [vmem:[#allocation2 + $0x8] sm:$0xff] %vm105, %v104
    // Predicated region
    $region22: #{combine_mlp.1} parent=1 // pred_check
      _
    $region23: #{combine_mlp.1} parent=1 // pred_check_branch
      %109 = sbr.rel (0) target = $region25
    $region24: #{combine_mlp.1} parent=1 // pred_region
      %111 = vsyncadd [#allocation3], 224
      %s112 = sshll.u32 [#allocation2], 4
      %s113 = int_to_ptr.vmem [resolvable:$true] %s112
      %s114 = sshll.u32 %s5, 4
      %s115 = int_to_ptr.hbm [resolvable:$true] %s114
      %120 = dma.vmem_to_hbm [thread:$0]  %s113, 32, %s115, [#allocation3], 32, 32, 2
    $region25: #{combine_mlp.1} parent=1 // pred_fallthru
      _
    // Predicated region
    $region26: #{combine_mlp.1} parent=1 // pred_check
      _
    $region27: #{combine_mlp.1} parent=1 // pred_check_branch
      %122 = sbr.rel (0) target = $region29
    $region28: #{combine_mlp.1} parent=1 // pred_region
      %124 = dma.done [#allocation3], 256
    $region29: #{combine_mlp.1} parent=1 // pred_fallthru
      _
    %125 = vsyncpa [#allocation3], 1

</llo_original>
